<compile_context>
chip_gen: v6e
topology: v6e:2x2x1
jax: 0.10.0
libtpu: 0.0.40
codegen_flags: <defaults>
</compile_context>

<pallas_src>
import functools

import jax
import jax.numpy as jnp
from jax.experimental import pallas as pl
from jax.experimental.pallas import tpu as pltpu


# ------------------------------ Pallas kernel ------------------------------ #

def _sdpa_kernel(q_ref, k_ref, v_ref, ctx_ref, attn_ref, *,
                 inv_scale, matmul_dtype, exact_softmax):
    # Blocks: q/ctx (bh_t, tq, Dk); k/v (bh_t, S, Dk); attn (bh_t, tq, S).
    q = (q_ref[...] * inv_scale).astype(matmul_dtype)   # fold 1/sqrt(d_k) into Q
    k = k_ref[...].astype(matmul_dtype)

    # Scores: contract last dims directly (MXU-native, no XLU transpose of K).
    s = jnp.einsum("bqd,bkd->bqk", q, k, preferred_element_type=jnp.float32)

    # Numerically stable softmax, entirely in f32.  Keep the number of live
    # (bh, tq, S) temporaries small: exp reuses `s`, attn is written before the
    # cast for the second matmul.
    s = jnp.exp(s - jnp.max(s, axis=-1, keepdims=True))
    denom = jnp.sum(s, axis=-1, keepdims=True)
    if exact_softmax:
        p = s / denom                                # exact divide (verification path)
    else:
        p = s * pl.reciprocal(denom, approx=True)    # EUP reciprocal (free slot)

    attn_ref[...] = p.astype(attn_ref.dtype)
    ctx_ref[...] = jnp.einsum(
        "bqk,bkd->bqd", p.astype(matmul_dtype), v_ref[...].astype(matmul_dtype),
        preferred_element_type=jnp.float32,
    ).astype(ctx_ref.dtype)


# --------------------------- tiling / VMEM budget ---------------------------- #

def _vmem_budget():
    """Returns (estimated-usage budget, scoped vmem_limit_bytes)."""
    try:
        phys = int(pltpu.get_tpu_info().vmem_capacity_bytes)
    except Exception:
        phys = 64 << 20                      # v7x has the smallest VMEM (64 MiB / TC)
    budget = max(8 << 20, int(phys * 0.40))  # target for estimated usage
    limit = max(32 << 20, int(phys * 0.55))  # explicit scoped limit (> v5e's 16 MiB default)
    limit = min(limit, phys - (4 << 20))
    return budget, limit


def _estimate_vmem(bh_t, tq, S, Dk):
    """Per-step VMEM: double-buffered blocks + ~3 full-size f32 softmax temps."""
    f32 = 4
    blocks = f32 * (bh_t * tq * Dk          # q
                    + 2 * bh_t * S * Dk     # k, v
                    + bh_t * tq * Dk        # ctx
                    + bh_t * tq * S)        # attn
    temps = 3 * f32 * bh_t * tq * S         # s/exp, p, cast copy of p
    return 2 * blocks + temps


def _choose_tiles(BH, S, Dk, budget):
    # q-tile candidates: full S, or divisors of S that are multiples of 8
    # (keeps the (8,128) block constraint satisfied for the attn/q blocks).
    tq_cands = [S] + sorted((d for d in range(8, S, 8) if S % d == 0), reverse=True)
    bh_cands = [d for d in range(BH, 0, -1) if BH % d == 0]

    tq = next((t for t in tq_cands if _estimate_vmem(1, t, S, Dk) <= budget),
              tq_cands[-1])
    bh_t = next((b for b in bh_cands if _estimate_vmem(b, tq, S, Dk) <= budget), 1)

    # Ensure >=2 (ideally >=4) grid steps for dual-TC sharding + pipelining.
    target_steps = min(4, BH * (S // tq))
    while bh_t > 1 and (BH // bh_t) * (S // tq) < target_steps:
        bh_t = next(b for b in bh_cands if b < bh_t)
    return bh_t, tq


# -------------------------------- wrapper ----------------------------------- #

def scaled_dot_product_attention(Q, K, V, mask=None, *,
                                 matmul_dtype=jnp.bfloat16,
                                 attn_dtype=jnp.float32,
                                 exact_softmax=None,
                                 bh_tile=None, q_tile=None):
    """Q, K, V: (B, H, S, Dk) f32. Returns (context (B,H,S,Dk) f32, attn (B*H,S,S))."""
    if mask is not None:
        # TODO(synk): masked variant would need the mask applied inside the
        # kernel before the row max/sum; not exercised by the reference.
        raise NotImplementedError("mask is not supported")

    if exact_softmax is None:
        exact_softmax = (matmul_dtype == jnp.float32)

    B, H, S, Dk = Q.shape
    BH = B * H
    q = Q.reshape(BH, S, Dk)
    k = K.reshape(BH, S, Dk)
    v = V.reshape(BH, S, Dk)

    budget, vmem_limit = _vmem_budget()
    auto_bh, auto_tq = _choose_tiles(BH, S, Dk, budget)
    if bh_tile is None:
        bh_tile = auto_bh
    if q_tile is None:
        q_tile = auto_tq
    assert BH % bh_tile == 0 and S % q_tile == 0

    # q-tile axis last: K/V block index is constant across it -> no re-DMA of K/V.
    grid = (BH // bh_tile, S // q_tile)

    kernel = functools.partial(
        _sdpa_kernel, inv_scale=1.0 / float(Dk) ** 0.5,
        matmul_dtype=matmul_dtype, exact_softmax=exact_softmax)

    ctx, attn = pl.pallas_call(
        kernel,
        out_shape=(
            jax.ShapeDtypeStruct((BH, S, Dk), jnp.float32),
            jax.ShapeDtypeStruct((BH, S, S), attn_dtype),
        ),
        grid=grid,
        in_specs=[
            pl.BlockSpec((bh_tile, q_tile, Dk), lambda i, j: (i, j, 0)),   # Q
            pl.BlockSpec((bh_tile, S, Dk), lambda i, j: (i, 0, 0)),        # K
            pl.BlockSpec((bh_tile, S, Dk), lambda i, j: (i, 0, 0)),        # V
        ],
        out_specs=(
            pl.BlockSpec((bh_tile, q_tile, Dk), lambda i, j: (i, j, 0)),   # context
            pl.BlockSpec((bh_tile, q_tile, S), lambda i, j: (i, j, 0)),    # attn
        ),
        compiler_params=pltpu.CompilerParams(
            dimension_semantics=("parallel", "parallel"),  # shards across TCs on v7x
            vmem_limit_bytes=int(vmem_limit),
        ),
    )(q, k, v)

    return ctx.reshape(B, H, S, Dk), attn


# --------------------------- pure-JAX reference ------------------------------ #

def reference(Q, K, V):
    B, H, S, Dk = Q.shape
    q = Q.reshape(B * H, S, Dk)
    k = K.reshape(B * H, S, Dk)
    v = V.reshape(B * H, S, Dk)
    s = jnp.einsum("bqd,bkd->bqk", q, k) / (Dk ** 0.5)
    attn = jax.nn.softmax(s, axis=-1)
    ctx = jnp.einsum("bqk,bkd->bqd", attn, v).reshape(B, H, S, Dk)
    return ctx, attn


# ----------------------------------- main ------------------------------------ #

if __name__ == "__main__":
    B, H, S, Dk = 2, 4, 8, 8   # d_model = H * Dk = 32

    key = jax.random.PRNGKey(0)
    kq, kk, kv = jax.random.split(key, 3)
    Q = jax.random.normal(kq, (B, H, S, Dk), jnp.float32)
    K = jax.random.normal(kk, (B, H, S, Dk), jnp.float32)
    V = jax.random.normal(kv, (B, H, S, Dk), jnp.float32)

    ctx_ref, attn_ref = reference(Q, K, V)

    # f32-operand path with exact-divide softmax: tight-tolerance verification.
    ctx32, attn32 = scaled_dot_product_attention(Q, K, V, matmul_dtype=jnp.float32)
    jax.block_until_ready((ctx32, attn32))
    assert ctx32.shape == (B, H, S, Dk)
    assert attn32.shape == (B * H, S, S)
    assert jnp.allclose(attn32, attn_ref, atol=2e-3, rtol=2e-3)
    assert jnp.allclose(ctx32, ctx_ref, atol=2e-3, rtol=2e-3)

    # Default bf16-MXU fast path (f32 accumulation + f32 softmax, approx recip).
    ctx_bf, attn_bf = scaled_dot_product_attention(Q, K, V)
    jax.block_until_ready((ctx_bf, attn_bf))
    assert ctx_bf.shape == (B, H, S, Dk)
    assert attn_bf.shape == (B * H, S, S)
    assert jnp.allclose(attn_bf, attn_ref, atol=2e-2, rtol=2e-2)
    assert jnp.allclose(ctx_bf, ctx_ref, atol=5e-2, rtol=5e-2)

    print("KERNEL_OK")
</pallas_src>

<mosaic_0001>
module attributes {stable_mosaic.version = 11 : i64} {
  func.func @_sdpa_kernel(%arg0: i32, %arg1: i32, %arg2: memref<2x8x8xf32, #tpu.memory_space<vmem>>, %arg3: memref<2x8x8xf32, #tpu.memory_space<vmem>>, %arg4: memref<2x8x8xf32, #tpu.memory_space<vmem>>, %arg5: memref<2x8x8xf32, #tpu.memory_space<vmem>>, %arg6: memref<2x8x8xf32, #tpu.memory_space<vmem>>) attributes {dimension_semantics = [#tpu.dimension_semantics<parallel>, #tpu.dimension_semantics<parallel>], iteration_bounds = array<i64: 4, 1>, scalar_prefetch = 0 : i64, scratch_operands = 0 : i64, tpu.core_type = #tpu.core_type<tc>, window_params = [{transform_indices = @transform_0, window_bounds = array<i64: 2, 8, 8>}, {transform_indices = @transform_1, window_bounds = array<i64: 2, 8, 8>}, {transform_indices = @transform_2, window_bounds = array<i64: 2, 8, 8>}, {transform_indices = @transform_3, window_bounds = array<i64: 2, 8, 8>}, {transform_indices = @transform_4, window_bounds = array<i64: 2, 8, 8>}]} {
    %c0 = arith.constant 0 : index
    %c0_0 = arith.constant 0 : index
    %c0_1 = arith.constant 0 : index
    %0 = vector.load %arg2[%c0, %c0_0, %c0_1] : memref<2x8x8xf32, #tpu.memory_space<vmem>>, vector<2x8x8xf32>
    %cst = arith.constant 0.353553385 : f32
    %1 = vector.broadcast %cst : f32 to vector<2x8x8xf32>
    %2 = arith.mulf %0, %1 : vector<2x8x8xf32>
    %c0_2 = arith.constant 0 : index
    %c0_3 = arith.constant 0 : index
    %c0_4 = arith.constant 0 : index
    %3 = vector.load %arg3[%c0_2, %c0_3, %c0_4] : memref<2x8x8xf32, #tpu.memory_space<vmem>>, vector<2x8x8xf32>
    "tpu.trace_start"() <{level = 10 : i32, message = "bqd,bkd->bqk"}> : () -> ()
    %cst_5 = arith.constant dense<0.000000e+00> : vector<2x8x8xf32>
    %4 = tpu.matmul %2, %3, %cst_5 {dimension_numbers = #tpu.dot_dimension_numbers<[2], [2], [1], [1], [0, 0, 0, 1, 1, 1], [0], [0]>} : vector<2x8x8xf32>, vector<2x8x8xf32>, vector<2x8x8xf32> -> vector<2x8x8xf32>
    "tpu.trace_stop"() : () -> ()
    %cst_6 = arith.constant dense<0xFF800000> : vector<2x8xf32>
    %5 = vector.multi_reduction <maximumf>, %4, %cst_6 [2] : vector<2x8x8xf32> to vector<2x8xf32>
    %6 = vector.shape_cast %5 : vector<2x8xf32> to vector<2x8x1xf32>
    %7 = vector.broadcast %6 : vector<2x8x1xf32> to vector<2x8x8xf32>
    %8 = arith.subf %4, %7 : vector<2x8x8xf32>
    %9 = math.exp %8 : vector<2x8x8xf32>
    %cst_7 = arith.constant dense<0.000000e+00> : vector<2x8xf32>
    %10 = vector.multi_reduction <add>, %9, %cst_7 [2] : vector<2x8x8xf32> to vector<2x8xf32>
    %11 = vector.shape_cast %10 : vector<2x8xf32> to vector<2x8x1xf32>
    %12 = vector.broadcast %11 : vector<2x8x1xf32> to vector<2x8x8xf32>
    %13 = arith.divf %9, %12 : vector<2x8x8xf32>
    %c0_8 = arith.constant 0 : index
    %c0_9 = arith.constant 0 : index
    %c0_10 = arith.constant 0 : index
    %14 = vector.load %arg6[%c0_8, %c0_9, %c0_10] : memref<2x8x8xf32, #tpu.memory_space<vmem>>, vector<2x8x8xf32>
    tpu.vector_store %arg6[%c0_8, %c0_9, %c0_10], %13 {strides = array<i32>} : memref<2x8x8xf32, #tpu.memory_space<vmem>>, vector<2x8x8xf32>,
    %c0_11 = arith.constant 0 : index
    %c0_12 = arith.constant 0 : index
    %c0_13 = arith.constant 0 : index
    %15 = vector.load %arg4[%c0_11, %c0_12, %c0_13] : memref<2x8x8xf32, #tpu.memory_space<vmem>>, vector<2x8x8xf32>
    "tpu.trace_start"() <{level = 10 : i32, message = "bqk,bkd->bqd"}> : () -> ()
    %cst_14 = arith.constant dense<0.000000e+00> : vector<2x8x8xf32>
    %16 = tpu.matmul %13, %15, %cst_14 {dimension_numbers = #tpu.dot_dimension_numbers<[2], [1], [1], [2], [0, 0, 0, 1, 1, 2], [0], [0]>} : vector<2x8x8xf32>, vector<2x8x8xf32>, vector<2x8x8xf32> -> vector<2x8x8xf32>
    "tpu.trace_stop"() : () -> ()
    %c0_15 = arith.constant 0 : index
    %c0_16 = arith.constant 0 : index
    %c0_17 = arith.constant 0 : index
    %17 = vector.load %arg5[%c0_15, %c0_16, %c0_17] : memref<2x8x8xf32, #tpu.memory_space<vmem>>, vector<2x8x8xf32>
    tpu.vector_store %arg5[%c0_15, %c0_16, %c0_17], %16 {strides = array<i32>} : memref<2x8x8xf32, #tpu.memory_space<vmem>>, vector<2x8x8xf32>,
    return
  }
  func.func @transform_0(%arg0: i32, %arg1: i32) -> (i32, i32, i32) {
    %c0_i32 = arith.constant 0 : i32
    %c0_i32_0 = arith.constant 0 : i32
    return %arg0, %arg1, %c0_i32 : i32, i32, i32
  }
  func.func @transform_1(%arg0: i32, %arg1: i32) -> (i32, i32, i32) {
    %c0_i32 = arith.constant 0 : i32
    %c0_i32_0 = arith.constant 0 : i32
    %c0_i32_1 = arith.constant 0 : i32
    return %arg0, %c0_i32, %c0_i32_0 : i32, i32, i32
  }
  func.func @transform_2(%arg0: i32, %arg1: i32) -> (i32, i32, i32) {
    %c0_i32 = arith.constant 0 : i32
    %c0_i32_0 = arith.constant 0 : i32
    %c0_i32_1 = arith.constant 0 : i32
    return %arg0, %c0_i32, %c0_i32_0 : i32, i32, i32
  }
  func.func @transform_3(%arg0: i32, %arg1: i32) -> (i32, i32, i32) {
    %c0_i32 = arith.constant 0 : i32
    %c0_i32_0 = arith.constant 0 : i32
    return %arg0, %arg1, %c0_i32 : i32, i32, i32
  }
  func.func @transform_4(%arg0: i32, %arg1: i32) -> (i32, i32, i32) {
    %c0_i32 = arith.constant 0 : i32
    %c0_i32_0 = arith.constant 0 : i32
    return %arg0, %arg1, %c0_i32 : i32, i32, i32
  }
}

</mosaic_0001>

<llo_original>
// kernel: tpu_custom_call.1
$region0: #{tpu_custom_call.1}
  #allocation0 [shape = 'u32[]', space=smem, size = 0x4, offset = 0x4, fixed_abs, tag = 'smem constant byte address 0x4 - core index']
  #allocation1 [shape = 'u32[144,128]{1,0:T(1,128)}', space=vmem, size = 0x12000, scoped, tag = 'internal scratch']
  %s0 = inlined_call_operand.hbm [shape: f32[8,8,8], index: 0, kind: input, shape index: {}]
  %s1 = inlined_call_operand.hbm [shape: f32[8,8,8], index: 1, kind: input, shape index: {}]
  %s2 = inlined_call_operand.hbm [shape: f32[8,8,8], index: 2, kind: input, shape index: {}]
  %s3 = inlined_call_operand.hbm [shape: f32[8,8,8], index: 3, kind: output, shape index: {0}]
  %s4 = inlined_call_operand.hbm [shape: f32[8,8,8], index: 4, kind: output, shape index: {1}]
  %5 = xla_tuple %s3, %s4
  %s6 = sld [smem:[#allocation0]]
  $region65: #{tpu_custom_call.1} parent=0
    _
  %s8 = ssub.s32 1, %s6
  %s9 = scalar_select 0, %s8, %s6
  $region1: #{tpu_custom_call.1} parent=0
    #allocation2 [shape = 'u8[16384]{0}', space=vmem, size = 0x4000, scoped, tag = 'input window, operand 0']
    #allocation3 [shape = 's32[2]{0}', space=sflag, size = 0x8, scoped, tag = 'scoped memory for tpu_custom_call.1']
    #allocation4 [shape = 's32[2]{0}', space=sflag, size = 0x8, scoped, tag = 'scoped memory for tpu_custom_call.1']
    #allocation5 [shape = 'u8[16384]{0}', space=vmem, size = 0x4000, scoped, tag = 'input window, operand 1']
    #allocation6 [shape = 's32[2]{0}', space=sflag, size = 0x8, scoped, tag = 'scoped memory for tpu_custom_call.1']
    #allocation7 [shape = 'u8[16384]{0}', space=vmem, size = 0x4000, scoped, tag = 'input window, operand 2']
    #allocation8 [shape = 'u8[16384]{0}', space=vmem, size = 0x4000, scoped, tag = 'output window, operand 0']
    #allocation9 [shape = 'u8[16384]{0}', space=vmem, size = 0x4000, scoped, tag = 'output window, operand 1']
    #allocation10 [shape = 's32[2]{0}', space=sflag, size = 0x8, scoped, tag = 'scoped memory for tpu_custom_call.1']
    %10 = vsyncpa [#allocation3], 0
    %s11 = scalar_lea.sflag [#allocation3], 1
    %12 = vsyncpa %s11, 0
    %13 = vsyncpa [#allocation6], 0
    %s14 = scalar_lea.sflag [#allocation6], 1
    %15 = vsyncpa %s14, 0
    %16 = vsyncpa [#allocation4], 0
    %s17 = scalar_lea.sflag [#allocation4], 1
    %18 = vsyncpa %s17, 0
    %19 = vsyncpa [#allocation10], 0
    %s20 = scalar_lea.sflag [#allocation10], 1
    %21 = vsyncpa %s20, 0
    loop: start=0, step=1, limit=6
    $region2: #{tpu_custom_call.1} parent=1 // loop_pre_header
      _
    $region3: #{tpu_custom_call.1} parent=1 // loop_header
      %s23 = sphi 0, %s27
      %p24 = scmp.ge.s32.totalorder %s23, 6
      %s30 = sphi 0, %s42
      %s31 = sphi 0, %s38
      %s32 = sphi 0, %s30
      %s33 = sphi 0, %s31
      %s34 = sphi 0, %s32
      %s35 = sphi 0, %s33
      %s47 = sphi 0, %s49
      %s50 = sphi 0, %s47
      %s51 = sphi 0, %s50
      %s67 = sphi 0, %s51
      %s73 = sphi 0, %s75
      %s76 = sphi 0, %s73
      %s77 = sphi 0, %s76
      %s93 = sphi 0, %s77
      %s99 = sphi 0, %s101
      %s102 = sphi 0, %s99
      %s103 = sphi 0, %s102
      %s119 = sphi 0, %s103
      %s127 = sphi 0, %s129
      %s130 = sphi 0, %s127
      %s131 = sphi 0, %s130
      %s147 = sphi 0, %s131
      %s155 = sphi 0, %s157
      %s158 = sphi 0, %s155
      %s159 = sphi 0, %s158
      %s175 = sphi 0, %s159
    $region4: #{tpu_custom_call.1} parent=1 // loop_header_branch
      %26 = sbr.rel (%p24) target = $region8
    $region5: #{tpu_custom_call.1} parent=1 // loop_body
      %s28 = ssub.s32 %s23, 1
      %s29 = ssub.s32 %s23, 2
      %s36 = sadd.s32 1, %s31
      %p37 = scmp.ge.s32.totalorder %s36, 1
      %s38 = scalar_select %p37, 0, %s36
      %s39 = sadd.s32 1, %s30
      %s40 = scalar_select %p37, %s39, %s30
      %p41 = scmp.ge.s32.totalorder %s40, 4
      %s42 = scalar_select %p41, 0, %s40
      %s43 = ssub.s32 %s30, %s42
      %s44 = ssub.s32 %s31, %s38
      %s45 = sor.u32 %s43, %s44
      %p46 = scmp.eq.s32.totalorder %s45, 0
      %s48 = sadd.s32 %s47, 1
      %s49 = scalar_select %p46, %s47, %s48
      %p52 = pneg %p46
      %p53 = scmp.eq.s32.totalorder %s23, 3
      %p54 = por %p52, %p53
      %p55 = scmp.ne.s32.totalorder %s47, %s50
      %p56 = scmp.eq.s32.totalorder %s23, 0
      %p57 = por %p55, %p56
      %p58 = scmp.ne.s32.totalorder %s47, %s50
      %p59 = scmp.eq.s32.totalorder %s28, 3
      %p60 = por %p58, %p59
      %p61 = scmp.ne.s32.totalorder %s50, %s51
      %p62 = scmp.eq.s32.totalorder %s28, 0
      %p63 = por %p61, %p62
      %p64 = scmp.ne.s32.totalorder %s50, %s51
      %p65 = scmp.eq.s32.totalorder %s29, 3
      %p66 = por %p64, %p65
      %p68 = scmp.ne.s32.totalorder %s51, %s67
      %p69 = scmp.eq.s32.totalorder %s29, 0
      %p70 = por %p68, %p69
      %s71 = ssub.s32 %s30, %s42
      %p72 = scmp.eq.s32.totalorder %s71, 0
      %s74 = sadd.s32 %s73, 1
      %s75 = scalar_select %p72, %s73, %s74
      %p78 = pneg %p72
      %p79 = scmp.eq.s32.totalorder %s23, 3
      %p80 = por %p78, %p79
      %p81 = scmp.ne.s32.totalorder %s73, %s76
      %p82 = scmp.eq.s32.totalorder %s23, 0
      %p83 = por %p81, %p82
      %p84 = scmp.ne.s32.totalorder %s73, %s76
      %p85 = scmp.eq.s32.totalorder %s28, 3
      %p86 = por %p84, %p85
      %p87 = scmp.ne.s32.totalorder %s76, %s77
      %p88 = scmp.eq.s32.totalorder %s28, 0
      %p89 = por %p87, %p88
      %p90 = scmp.ne.s32.totalorder %s76, %s77
      %p91 = scmp.eq.s32.totalorder %s29, 3
      %p92 = por %p90, %p91
      %p94 = scmp.ne.s32.totalorder %s77, %s93
      %p95 = scmp.eq.s32.totalorder %s29, 0
      %p96 = por %p94, %p95
      %s97 = ssub.s32 %s30, %s42
      %p98 = scmp.eq.s32.totalorder %s97, 0
      %s100 = sadd.s32 %s99, 1
      %s101 = scalar_select %p98, %s99, %s100
      %p104 = pneg %p98
      %p105 = scmp.eq.s32.totalorder %s23, 3
      %p106 = por %p104, %p105
      %p107 = scmp.ne.s32.totalorder %s99, %s102
      %p108 = scmp.eq.s32.totalorder %s23, 0
      %p109 = por %p107, %p108
      %p110 = scmp.ne.s32.totalorder %s99, %s102
      %p111 = scmp.eq.s32.totalorder %s28, 3
      %p112 = por %p110, %p111
      %p113 = scmp.ne.s32.totalorder %s102, %s103
      %p114 = scmp.eq.s32.totalorder %s28, 0
      %p115 = por %p113, %p114
      %p116 = scmp.ne.s32.totalorder %s102, %s103
      %p117 = scmp.eq.s32.totalorder %s29, 3
      %p118 = por %p116, %p117
      %p120 = scmp.ne.s32.totalorder %s103, %s119
      %p121 = scmp.eq.s32.totalorder %s29, 0
      %p122 = por %p120, %p121
      %s123 = ssub.s32 %s30, %s42
      %s124 = ssub.s32 %s31, %s38
      %s125 = sor.u32 %s123, %s124
      %p126 = scmp.eq.s32.totalorder %s125, 0
      %s128 = sadd.s32 %s127, 1
      %s129 = scalar_select %p126, %s127, %s128
      %p132 = pneg %p126
      %p133 = scmp.eq.s32.totalorder %s23, 3
      %p134 = por %p132, %p133
      %p135 = scmp.ne.s32.totalorder %s127, %s130
      %p136 = scmp.eq.s32.totalorder %s23, 0
      %p137 = por %p135, %p136
      %p138 = scmp.ne.s32.totalorder %s127, %s130
      %p139 = scmp.eq.s32.totalorder %s28, 3
      %p140 = por %p138, %p139
      %p141 = scmp.ne.s32.totalorder %s130, %s131
      %p142 = scmp.eq.s32.totalorder %s28, 0
      %p143 = por %p141, %p142
      %p144 = scmp.ne.s32.totalorder %s130, %s131
      %p145 = scmp.eq.s32.totalorder %s29, 3
      %p146 = por %p144, %p145
      %p148 = scmp.ne.s32.totalorder %s131, %s147
      %p149 = scmp.eq.s32.totalorder %s29, 0
      %p150 = por %p148, %p149
      %s151 = ssub.s32 %s30, %s42
      %s152 = ssub.s32 %s31, %s38
      %s153 = sor.u32 %s151, %s152
      %p154 = scmp.eq.s32.totalorder %s153, 0
      %s156 = sadd.s32 %s155, 1
      %s157 = scalar_select %p154, %s155, %s156
      %p160 = pneg %p154
      %p161 = scmp.eq.s32.totalorder %s23, 3
      %p162 = por %p160, %p161
      %p163 = scmp.ne.s32.totalorder %s155, %s158
      %p164 = scmp.eq.s32.totalorder %s23, 0
      %p165 = por %p163, %p164
      %p166 = scmp.ne.s32.totalorder %s155, %s158
      %p167 = scmp.eq.s32.totalorder %s28, 3
      %p168 = por %p166, %p167
      %p169 = scmp.ne.s32.totalorder %s158, %s159
      %p170 = scmp.eq.s32.totalorder %s28, 0
      %p171 = por %p169, %p170
      %p172 = scmp.ne.s32.totalorder %s158, %s159
      %p173 = scmp.eq.s32.totalorder %s29, 3
      %p174 = por %p172, %p173
      %p176 = scmp.ne.s32.totalorder %s159, %s175
      %p177 = scmp.eq.s32.totalorder %s29, 0
      %p178 = por %p176, %p177
      %p179 = scmp.le.s32.totalorder 1, %s23
      %p180 = scmp.lt.s32.totalorder %s23, 5
      %p181 = pnand %p179, %p180
      %p182 = pneg %p181
      // Predicated region
      $region9: #{tpu_custom_call.1} parent=5 // pred_check
        _
      $region10: #{tpu_custom_call.1} parent=5 // pred_check_branch
        %184 = sbr.rel (%p181) target = $region12
      $region11: #{tpu_custom_call.1} parent=5 // pred_region
        %s185 = ssub.s32 %s23, 1
      $region12: #{tpu_custom_call.1} parent=5 // pred_fallthru
        _
      %p186 = scmp.lt.s32.totalorder %s23, 4
      // Predicated region
      $region13: #{tpu_custom_call.1} parent=5 // pred_check
        %p187 = pneg %p186
      $region14: #{tpu_custom_call.1} parent=5 // pred_check_branch
        %189 = sbr.rel (%p187) target = $region16
      $region15: #{tpu_custom_call.1} parent=5 // pred_region
        // Predicated region
        $region17: #{tpu_custom_call.1} parent=15 // pred_check
          %p190 = pneg %p57
        $region18: #{tpu_custom_call.1} parent=15 // pred_check_branch
          %192 = sbr.rel (%p190) target = $region20
        $region19: #{tpu_custom_call.1} parent=15 // pred_region
          %s193 = sand.u32 %s47, 1
          %s194 = scalar_lea.sflag [#allocation3], %s193
          %s195 = sand.u32 %s47, 1
          %s196 = smul.addr %s195, 16
          %s197 = scalar_lea.vmem [#allocation2], %s196
          %s198 = smul.u32 2, %s30
          %s200 = ssub.s32 256, 256
          %201 = vsyncadd %s194, %s200
          %s202 = sadd.s32 %s31, %s198
          %s203 = smul.addr %s202, 128
          %s204 = scalar_lea.hbm %s0, %s203
          %s205 = sshll.u32 %s197, 4
          %s206 = int_to_ptr.vmem [resolvable:$true] %s205
          %211 = dma.hbm_to_vmem [thread:$0]  %s204, 256, %s206, %s194, 128, 128, 8
        $region20: #{tpu_custom_call.1} parent=15 // pred_fallthru
          _
        // Predicated region
        $region21: #{tpu_custom_call.1} parent=15 // pred_check
          %p212 = pneg %p83
        $region22: #{tpu_custom_call.1} parent=15 // pred_check_branch
          %214 = sbr.rel (%p212) target = $region24
        $region23: #{tpu_custom_call.1} parent=15 // pred_region
          %s215 = sand.u32 %s23, 1
          %s216 = scalar_lea.sflag [#allocation6], %s215
          %s217 = sand.u32 %s73, 1
          %s218 = smul.addr %s217, 16
          %s219 = scalar_lea.vmem [#allocation5], %s218
          %s220 = smul.u32 2, %s30
          %s222 = ssub.s32 256, 256
          %223 = vsyncadd %s216, %s222
          %s224 = smul.addr %s220, 128
          %s225 = scalar_lea.hbm %s1, %s224
          %s226 = sshll.u32 %s219, 4
          %s227 = int_to_ptr.vmem [resolvable:$true] %s226
          %232 = dma.hbm_to_vmem [thread:$0]  %s225, 256, %s227, %s216, 128, 128, 8
        $region24: #{tpu_custom_call.1} parent=15 // pred_fallthru
          _
        // Predicated region
        $region25: #{tpu_custom_call.1} parent=15 // pred_check
          %p233 = pneg %p109
        $region26: #{tpu_custom_call.1} parent=15 // pred_check_branch
          %235 = sbr.rel (%p233) target = $region28
        $region27: #{tpu_custom_call.1} parent=15 // pred_region
          %s236 = sand.u32 %s23, 1
          %s237 = scalar_lea.sflag [#allocation6], %s236
          %s238 = sand.u32 %s99, 1
          %s239 = smul.addr %s238, 16
          %s240 = scalar_lea.vmem [#allocation7], %s239
          %s241 = smul.u32 2, %s30
          %s243 = ssub.s32 256, 256
          %244 = vsyncadd %s237, %s243
          %s245 = smul.addr %s241, 128
          %s246 = scalar_lea.hbm %s2, %s245
          %s247 = sshll.u32 %s240, 4
          %s248 = int_to_ptr.vmem [resolvable:$true] %s247
          %253 = dma.hbm_to_vmem [thread:$0]  %s246, 256, %s248, %s237, 128, 128, 8
        $region28: #{tpu_custom_call.1} parent=15 // pred_fallthru
          _
      $region16: #{tpu_custom_call.1} parent=5 // pred_fallthru
        _
      %p254 = scmp.le.s32.totalorder 1, %s23
      %p255 = scmp.lt.s32.totalorder %s23, 5
      %p256 = pnand %p254, %p255
      %p257 = pneg %p256
      // Predicated region
      $region29: #{tpu_custom_call.1} parent=5 // pred_check
        _
      $region30: #{tpu_custom_call.1} parent=5 // pred_check_branch
        %259 = sbr.rel (%p256) target = $region32
      $region31: #{tpu_custom_call.1} parent=5 // pred_region
        %s260 = ssub.s32 %s23, 1
        %s261 = sand.u32 %s50, 1
        %s262 = scalar_lea.sflag [#allocation3], %s261
        %s263 = sand.u32 %s50, 1
        %s264 = smul.addr %s263, 16
        %s265 = scalar_lea.vmem [#allocation2], %s264
        // Predicated region
        $region33: #{tpu_custom_call.1} parent=31 // pred_check
          %p266 = pneg %p63
        $region34: #{tpu_custom_call.1} parent=31 // pred_check_branch
          %268 = sbr.rel (%p266) target = $region36
        $region35: #{tpu_custom_call.1} parent=31 // pred_region
          %269 = dma.done %s262, 256
        $region36: #{tpu_custom_call.1} parent=31 // pred_fallthru
          _
        %s270 = sand.u32 %s28, 1
        %s271 = scalar_lea.sflag [#allocation6], %s270
        %s272 = sand.u32 %s76, 1
        %s273 = smul.addr %s272, 16
        %s274 = scalar_lea.vmem [#allocation5], %s273
        // Predicated region
        $region37: #{tpu_custom_call.1} parent=31 // pred_check
          %p275 = pneg %p89
        $region38: #{tpu_custom_call.1} parent=31 // pred_check_branch
          %277 = sbr.rel (%p275) target = $region40
        $region39: #{tpu_custom_call.1} parent=31 // pred_region
          %278 = dma.done %s271, 256
        $region40: #{tpu_custom_call.1} parent=31 // pred_fallthru
          _
        %s279 = sand.u32 %s28, 1
        %s280 = scalar_lea.sflag [#allocation6], %s279
        %s281 = sand.u32 %s102, 1
        %s282 = smul.addr %s281, 16
        %s283 = scalar_lea.vmem [#allocation7], %s282
        // Predicated region
        $region41: #{tpu_custom_call.1} parent=31 // pred_check
          %p284 = pneg %p115
        $region42: #{tpu_custom_call.1} parent=31 // pred_check_branch
          %286 = sbr.rel (%p284) target = $region44
        $region43: #{tpu_custom_call.1} parent=31 // pred_region
          %287 = dma.done %s280, 256
        $region44: #{tpu_custom_call.1} parent=31 // pred_fallthru
          _
        %s288 = sand.u32 %s50, 1
        %s289 = scalar_lea.sflag [#allocation3], %s288
        %s290 = sand.u32 %s50, 1
        %s291 = smul.addr %s290, 16
        %s292 = scalar_lea.vmem [#allocation2], %s291
        %p293 = pneg %p63
        %p294 = pneg %p60
        %s295 = sand.u32 %s28, 1
        %s296 = scalar_lea.sflag [#allocation6], %s295
        %s297 = sand.u32 %s76, 1
        %s298 = smul.addr %s297, 16
        %s299 = scalar_lea.vmem [#allocation5], %s298
        %p300 = pneg %p89
        %p301 = pneg %p86
        %s302 = sand.u32 %s28, 1
        %s303 = scalar_lea.sflag [#allocation6], %s302
        %s304 = sand.u32 %s102, 1
        %s305 = smul.addr %s304, 16
        %s306 = scalar_lea.vmem [#allocation7], %s305
        %p307 = pneg %p115
        %p308 = pneg %p112
        %p309 = pneg %p143
        %p310 = pneg %p140
        %s311 = sand.u32 %s130, 1
        %s312 = scalar_lea.sflag [#allocation4], %s311
        %s313 = sand.u32 %s130, 1
        %s314 = smul.addr %s313, 16
        %s315 = scalar_lea.vmem [#allocation8], %s314
        %p316 = pneg %p171
        %p317 = pneg %p168
        %s318 = sand.u32 %s158, 1
        %s319 = scalar_lea.sflag [#allocation10], %s318
        %s320 = sand.u32 %s158, 1
        %s321 = smul.addr %s320, 16
        %s322 = scalar_lea.vmem [#allocation9], %s321
        %s323 = smul.u32 2, %s32
        %s324 = smul.u32 2, %s32
        %s325 = smul.u32 2, %s32
        %s326 = smul.u32 2, %s32
        %s327 = smul.u32 2, %s32
        %v328 = vld [vmem:[%s265] sm:$0xff]
        %v329 = vld [vmem:[%s265 + $0x8] sm:$0xff]
        %v330 = vmul.f32 %v328, 0.35355338
        %v331 = vmul.f32 %v329, 0.35355338
        %v332 = vld [vmem:[%s274] sm:$0xff]
        %v333 = vld [vmem:[%s274 + $0x8] sm:$0xff]
        %vm334 = vcmask 64512
        %v336 = vsel %vm334, %v330, 0
        %v339 = vsel %vm334, %v332, 0
        %341 = vmatprep.subr.mxu0 0.0
        %342 = vmatpush1.xpose.msra.mxu0 0.0
        %343 = vmatprep.subr.mxu0 0.0
        %344 = vmatpush1.xpose.msra.mxu0 0.0
        %345 = vmatprep.subr.mxu0 0.0
        %346 = vmatpush1.xpose.msra.mxu0 0.0
        %347 = vmatprep.subr.mxu0 0.0
        %348 = vmatpush1.xpose.msra.mxu0 0.0
        %349 = vmatprep.subr.mxu0 0.0
        %350 = vmatpush1.xpose.msra.mxu0 0.0
        %351 = vmatprep.subr.mxu0 0.0
        %352 = vmatpush1.xpose.msra.mxu0 0.0
        %353 = vmatprep.subr.mxu0 0.0
        %354 = vmatpush1.xpose.msra.mxu0 0.0
        %355 = vmatprep.subr.mxu0 0.0
        %356 = vmatpush1.xpose.msra.mxu0 0.0
        %357 = vmatprep.subr.mxu0 0.0
        %358 = vmatpush1.xpose.msra.mxu0 0.0
        %359 = vmatprep.subr.mxu0 0.0
        %360 = vmatpush1.xpose.msra.mxu0 0.0
        %361 = vmatprep.subr.mxu0 0.0
        %362 = vmatpush1.xpose.msra.mxu0 0.0
        %363 = vmatprep.subr.mxu0 0.0
        %364 = vmatpush1.xpose.msra.mxu0 0.0
        %365 = vmatprep.subr.mxu0 0.0
        %366 = vmatpush1.xpose.msra.mxu0 0.0
        %367 = vmatprep.subr.mxu0 0.0
        %368 = vmatpush1.xpose.msra.mxu0 0.0
        %369 = vmatprep.subr.mxu0 0.0
        %370 = vmatpush1.xpose.msra.mxu0 0.0
        %371 = vmatprep.subr.mxu0 0.0
        %372 = vmatpush1.xpose.msra.mxu0 %v339
        %373 = vmatprep.subr.mxu0 0.0
        %374 = vmatpush2.xpose.msra.mxu0 0.0
        %375 = vmatprep.subr.mxu0 0.0
        %376 = vmatpush2.xpose.msra.mxu0 0.0
        %377 = vmatprep.subr.mxu0 0.0
        %378 = vmatpush2.xpose.msra.mxu0 0.0
        %379 = vmatprep.subr.mxu0 0.0
        %380 = vmatpush2.xpose.msra.mxu0 0.0
        %381 = vmatprep.subr.mxu0 0.0
        %382 = vmatpush2.xpose.msra.mxu0 0.0
        %383 = vmatprep.subr.mxu0 0.0
        %384 = vmatpush2.xpose.msra.mxu0 0.0
        %385 = vmatprep.subr.mxu0 0.0
        %386 = vmatpush2.xpose.msra.mxu0 0.0
        %387 = vmatprep.subr.mxu0 0.0
        %388 = vmatpush2.xpose.msra.mxu0 0.0
        %389 = vmatprep.subr.mxu0 0.0
        %390 = vmatpush2.xpose.msra.mxu0 0.0
        %391 = vmatprep.subr.mxu0 0.0
        %392 = vmatpush2.xpose.msra.mxu0 0.0
        %393 = vmatprep.subr.mxu0 0.0
        %394 = vmatpush2.xpose.msra.mxu0 0.0
        %395 = vmatprep.subr.mxu0 0.0
        %396 = vmatpush2.xpose.msra.mxu0 0.0
        %397 = vmatprep.subr.mxu0 0.0
        %398 = vmatpush2.xpose.msra.mxu0 0.0
        %399 = vmatprep.subr.mxu0 0.0
        %400 = vmatpush2.xpose.msra.mxu0 0.0
        %401 = vmatprep.subr.mxu0 0.0
        %402 = vmatpush2.xpose.msra.mxu0 0.0
        %403 = vmatprep.subr.mxu0 0.0
        %404 = vmatpush2.xpose.msra.mxu0 0.0
        %405 = vmatprep.mubr.f32.mxu0 0.0
        %406 = vmatmul.mubr.f32.gmra.mxu0 %v336
        %v407 = vpop.f32.mrf.mxu0
        %v408 = vadd.f32 0.0, %v407
        %v409 = vpop.f32.mrf.mxu0
        %410 = vdwg.mxu0
        %v412 = vsel %vm334, %v331, 0
        %v415 = vsel %vm334, %v333, 0
        %417 = vmatprep.subr.mxu0 0.0
        %418 = vmatpush1.xpose.msra.mxu0 0.0
        %419 = vmatprep.subr.mxu0 0.0
        %420 = vmatpush1.xpose.msra.mxu0 0.0
        %421 = vmatprep.subr.mxu0 0.0
        %422 = vmatpush1.xpose.msra.mxu0 0.0
        %423 = vmatprep.subr.mxu0 0.0
        %424 = vmatpush1.xpose.msra.mxu0 0.0
        %425 = vmatprep.subr.mxu0 0.0
        %426 = vmatpush1.xpose.msra.mxu0 0.0
        %427 = vmatprep.subr.mxu0 0.0
        %428 = vmatpush1.xpose.msra.mxu0 0.0
        %429 = vmatprep.subr.mxu0 0.0
        %430 = vmatpush1.xpose.msra.mxu0 0.0
        %431 = vmatprep.subr.mxu0 0.0
        %432 = vmatpush1.xpose.msra.mxu0 0.0
        %433 = vmatprep.subr.mxu0 0.0
        %434 = vmatpush1.xpose.msra.mxu0 0.0
        %435 = vmatprep.subr.mxu0 0.0
        %436 = vmatpush1.xpose.msra.mxu0 0.0
        %437 = vmatprep.subr.mxu0 0.0
        %438 = vmatpush1.xpose.msra.mxu0 0.0
        %439 = vmatprep.subr.mxu0 0.0
        %440 = vmatpush1.xpose.msra.mxu0 0.0
        %441 = vmatprep.subr.mxu0 0.0
        %442 = vmatpush1.xpose.msra.mxu0 0.0
        %443 = vmatprep.subr.mxu0 0.0
        %444 = vmatpush1.xpose.msra.mxu0 0.0
        %445 = vmatprep.subr.mxu0 0.0
        %446 = vmatpush1.xpose.msra.mxu0 0.0
        %447 = vmatprep.subr.mxu0 0.0
        %448 = vmatpush1.xpose.msra.mxu0 %v415
        %449 = vmatprep.subr.mxu0 0.0
        %450 = vmatpush2.xpose.msra.mxu0 0.0
        %451 = vmatprep.subr.mxu0 0.0
        %452 = vmatpush2.xpose.msra.mxu0 0.0
        %453 = vmatprep.subr.mxu0 0.0
        %454 = vmatpush2.xpose.msra.mxu0 0.0
        %455 = vmatprep.subr.mxu0 0.0
        %456 = vmatpush2.xpose.msra.mxu0 0.0
        %457 = vmatprep.subr.mxu0 0.0
        %458 = vmatpush2.xpose.msra.mxu0 0.0
        %459 = vmatprep.subr.mxu0 0.0
        %460 = vmatpush2.xpose.msra.mxu0 0.0
        %461 = vmatprep.subr.mxu0 0.0
        %462 = vmatpush2.xpose.msra.mxu0 0.0
        %463 = vmatprep.subr.mxu0 0.0
        %464 = vmatpush2.xpose.msra.mxu0 0.0
        %465 = vmatprep.subr.mxu0 0.0
        %466 = vmatpush2.xpose.msra.mxu0 0.0
        %467 = vmatprep.subr.mxu0 0.0
        %468 = vmatpush2.xpose.msra.mxu0 0.0
        %469 = vmatprep.subr.mxu0 0.0
        %470 = vmatpush2.xpose.msra.mxu0 0.0
        %471 = vmatprep.subr.mxu0 0.0
        %472 = vmatpush2.xpose.msra.mxu0 0.0
        %473 = vmatprep.subr.mxu0 0.0
        %474 = vmatpush2.xpose.msra.mxu0 0.0
        %475 = vmatprep.subr.mxu0 0.0
        %476 = vmatpush2.xpose.msra.mxu0 0.0
        %477 = vmatprep.subr.mxu0 0.0
        %478 = vmatpush2.xpose.msra.mxu0 0.0
        %479 = vmatprep.subr.mxu0 0.0
        %480 = vmatpush2.xpose.msra.mxu0 0.0
        %481 = vmatprep.mubr.f32.mxu0 0.0
        %482 = vmatmul.mubr.f32.gmra.mxu0 %v412
        %v483 = vpop.f32.mrf.mxu0
        %v484 = vadd.f32 0.0, %v483
        %v485 = vpop.f32.mrf.mxu0
        %486 = vdwg.mxu0
        %v487 = vsel %vm334, %v408, -inf
        %488 = vmax.xlane.f32.xlu0 %v487
        %v489 = vpop.xlane.xlu0 %488
        %v490 = vsel %vm334, %v484, -inf
        %491 = vmax.xlane.f32.xlu0 %v490
        %v492 = vpop.xlane.xlu0 %491
        %v493 = vsub.f32 %v408, %v489
        %v494 = vsub.f32 %v484, %v492
        %v495 = vmul.f32 %v493, 1.442695
        %v496 = vpow.pop %v495
        %v497 = vmul.f32 %v494, 1.442695
        %v498 = vpow.pop %v497
        %v499 = vsel %vm334, %v496, 0.0
        %500 = vadd.xlane.f32.xlu0 %v499
        %v501 = vpop.xlane.xlu0 %500
        %v502 = vsel %vm334, %v498, 0.0
        %503 = vadd.xlane.f32.xlu0 %v502
        %v504 = vpop.xlane.xlu0 %503
        %v505 = vrcp.pop %v501
        %v506 = vmul.f32 %v496, %v505
        %v507 = vrcp.pop %v504
        %v508 = vmul.f32 %v498, %v507
        %509 = vst.msk [vmem:[%s322] sm:$0xff] %vm334, %v506
        %510 = vst.msk [vmem:[%s322 + $0x8] sm:$0xff] %vm334, %v508
        %v511 = vld [vmem:[%s283] sm:$0xff]
        %v512 = vld [vmem:[%s283 + $0x8] sm:$0xff]
        %v514 = vsel %vm334, %v506, 0
        %516 = vmatprep.subr.mxu0 0.0
        %517 = vmatpush1.msra.mxu0 0.0
        %518 = vmatprep.subr.mxu0 0.0
        %519 = vmatpush1.msra.mxu0 0.0
        %520 = vmatprep.subr.mxu0 0.0
        %521 = vmatpush1.msra.mxu0 0.0
        %522 = vmatprep.subr.mxu0 0.0
        %523 = vmatpush1.msra.mxu0 0.0
        %524 = vmatprep.subr.mxu0 0.0
        %525 = vmatpush1.msra.mxu0 0.0
        %526 = vmatprep.subr.mxu0 0.0
        %527 = vmatpush1.msra.mxu0 0.0
        %528 = vmatprep.subr.mxu0 0.0
        %529 = vmatpush1.msra.mxu0 0.0
        %530 = vmatprep.subr.mxu0 0.0
        %531 = vmatpush1.msra.mxu0 0.0
        %532 = vmatprep.subr.mxu0 0.0
        %533 = vmatpush1.msra.mxu0 0.0
        %534 = vmatprep.subr.mxu0 0.0
        %535 = vmatpush1.msra.mxu0 0.0
        %536 = vmatprep.subr.mxu0 0.0
        %537 = vmatpush1.msra.mxu0 0.0
        %538 = vmatprep.subr.mxu0 0.0
        %539 = vmatpush1.msra.mxu0 0.0
        %540 = vmatprep.subr.mxu0 0.0
        %541 = vmatpush1.msra.mxu0 0.0
        %542 = vmatprep.subr.mxu0 0.0
        %543 = vmatpush1.msra.mxu0 0.0
        %544 = vmatprep.subr.mxu0 0.0
        %545 = vmatpush1.msra.mxu0 0.0
        %546 = vmatprep.subr.mxu0 0.0
        %547 = vmatpush1.msra.mxu0 %v511
        %548 = vmatprep.subr.mxu0 0.0
        %549 = vmatpush2.msra.mxu0 0.0
        %550 = vmatprep.subr.mxu0 0.0
        %551 = vmatpush2.msra.mxu0 0.0
        %552 = vmatprep.subr.mxu0 0.0
        %553 = vmatpush2.msra.mxu0 0.0
        %554 = vmatprep.subr.mxu0 0.0
        %555 = vmatpush2.msra.mxu0 0.0
        %556 = vmatprep.subr.mxu0 0.0
        %557 = vmatpush2.msra.mxu0 0.0
        %558 = vmatprep.subr.mxu0 0.0
        %559 = vmatpush2.msra.mxu0 0.0
        %560 = vmatprep.subr.mxu0 0.0
        %561 = vmatpush2.msra.mxu0 0.0
        %562 = vmatprep.subr.mxu0 0.0
        %563 = vmatpush2.msra.mxu0 0.0
        %564 = vmatprep.subr.mxu0 0.0
        %565 = vmatpush2.msra.mxu0 0.0
        %566 = vmatprep.subr.mxu0 0.0
        %567 = vmatpush2.msra.mxu0 0.0
        %568 = vmatprep.subr.mxu0 0.0
        %569 = vmatpush2.msra.mxu0 0.0
        %570 = vmatprep.subr.mxu0 0.0
        %571 = vmatpush2.msra.mxu0 0.0
        %572 = vmatprep.subr.mxu0 0.0
        %573 = vmatpush2.msra.mxu0 0.0
        %574 = vmatprep.subr.mxu0 0.0
        %575 = vmatpush2.msra.mxu0 0.0
        %576 = vmatprep.subr.mxu0 0.0
        %577 = vmatpush2.msra.mxu0 0.0
        %578 = vmatprep.subr.mxu0 0.0
        %579 = vmatpush2.msra.mxu0 0.0
        %580 = vmatprep.mubr.f32.mxu0 0.0
        %581 = vmatmul.mubr.f32.gmra.mxu0 %v514
        %v582 = vpop.f32.mrf.mxu0
        %v583 = vadd.f32 0.0, %v582
        %v584 = vpop.f32.mrf.mxu0
        %585 = vdwg.mxu0
        %v587 = vsel %vm334, %v508, 0
        %589 = vmatprep.subr.mxu0 0.0
        %590 = vmatpush1.msra.mxu0 0.0
        %591 = vmatprep.subr.mxu0 0.0
        %592 = vmatpush1.msra.mxu0 0.0
        %593 = vmatprep.subr.mxu0 0.0
        %594 = vmatpush1.msra.mxu0 0.0
        %595 = vmatprep.subr.mxu0 0.0
        %596 = vmatpush1.msra.mxu0 0.0
        %597 = vmatprep.subr.mxu0 0.0
        %598 = vmatpush1.msra.mxu0 0.0
        %599 = vmatprep.subr.mxu0 0.0
        %600 = vmatpush1.msra.mxu0 0.0
        %601 = vmatprep.subr.mxu0 0.0
        %602 = vmatpush1.msra.mxu0 0.0
        %603 = vmatprep.subr.mxu0 0.0
        %604 = vmatpush1.msra.mxu0 0.0
        %605 = vmatprep.subr.mxu0 0.0
        %606 = vmatpush1.msra.mxu0 0.0
        %607 = vmatprep.subr.mxu0 0.0
        %608 = vmatpush1.msra.mxu0 0.0
        %609 = vmatprep.subr.mxu0 0.0
        %610 = vmatpush1.msra.mxu0 0.0
        %611 = vmatprep.subr.mxu0 0.0
        %612 = vmatpush1.msra.mxu0 0.0
        %613 = vmatprep.subr.mxu0 0.0
        %614 = vmatpush1.msra.mxu0 0.0
        %615 = vmatprep.subr.mxu0 0.0
        %616 = vmatpush1.msra.mxu0 0.0
        %617 = vmatprep.subr.mxu0 0.0
        %618 = vmatpush1.msra.mxu0 0.0
        %619 = vmatprep.subr.mxu0 0.0
        %620 = vmatpush1.msra.mxu0 %v512
        %621 = vmatprep.subr.mxu0 0.0
        %622 = vmatpush2.msra.mxu0 0.0
        %623 = vmatprep.subr.mxu0 0.0
        %624 = vmatpush2.msra.mxu0 0.0
        %625 = vmatprep.subr.mxu0 0.0
        %626 = vmatpush2.msra.mxu0 0.0
        %627 = vmatprep.subr.mxu0 0.0
        %628 = vmatpush2.msra.mxu0 0.0
        %629 = vmatprep.subr.mxu0 0.0
        %630 = vmatpush2.msra.mxu0 0.0
        %631 = vmatprep.subr.mxu0 0.0
        %632 = vmatpush2.msra.mxu0 0.0
        %633 = vmatprep.subr.mxu0 0.0
        %634 = vmatpush2.msra.mxu0 0.0
        %635 = vmatprep.subr.mxu0 0.0
        %636 = vmatpush2.msra.mxu0 0.0
        %637 = vmatprep.subr.mxu0 0.0
        %638 = vmatpush2.msra.mxu0 0.0
        %639 = vmatprep.subr.mxu0 0.0
        %640 = vmatpush2.msra.mxu0 0.0
        %641 = vmatprep.subr.mxu0 0.0
        %642 = vmatpush2.msra.mxu0 0.0
        %643 = vmatprep.subr.mxu0 0.0
        %644 = vmatpush2.msra.mxu0 0.0
        %645 = vmatprep.subr.mxu0 0.0
        %646 = vmatpush2.msra.mxu0 0.0
        %647 = vmatprep.subr.mxu0 0.0
        %648 = vmatpush2.msra.mxu0 0.0
        %649 = vmatprep.subr.mxu0 0.0
        %650 = vmatpush2.msra.mxu0 0.0
        %651 = vmatprep.subr.mxu0 0.0
        %652 = vmatpush2.msra.mxu0 0.0
        %653 = vmatprep.mubr.f32.mxu0 0.0
        %654 = vmatmul.mubr.f32.gmra.mxu0 %v587
        %v655 = vpop.f32.mrf.mxu0
        %v656 = vadd.f32 0.0, %v655
        %v657 = vpop.f32.mrf.mxu0
        %658 = vdwg.mxu0
        %659 = vst.msk [vmem:[%s315] sm:$0xff] %vm334, %v583
        %660 = vst.msk [vmem:[%s315 + $0x8] sm:$0xff] %vm334, %v656
        %s661 = sand.u32 %s130, 1
        %s662 = scalar_lea.sflag [#allocation4], %s661
        %s663 = sand.u32 %s130, 1
        %s664 = smul.addr %s663, 16
        %s665 = scalar_lea.vmem [#allocation8], %s664
        %s666 = sand.u32 %s158, 1
        %s667 = scalar_lea.sflag [#allocation10], %s666
        %s668 = sand.u32 %s158, 1
        %s669 = smul.addr %s668, 16
        %s670 = scalar_lea.vmem [#allocation9], %s669
        // Predicated region
        $region45: #{tpu_custom_call.1} parent=31 // pred_check
          %p671 = pneg %p140
        $region46: #{tpu_custom_call.1} parent=31 // pred_check_branch
          %673 = sbr.rel (%p671) target = $region48
        $region47: #{tpu_custom_call.1} parent=31 // pred_region
          %s674 = smul.u32 2, %s32
          %s676 = ssub.s32 256, 256
          %677 = vsyncadd %s662, %s676
          %s678 = sadd.s32 %s33, %s674
          %s679 = smul.addr %s678, 128
          %s680 = scalar_lea.hbm %s3, %s679
          %s681 = sshll.u32 %s665, 4
          %s682 = int_to_ptr.vmem [resolvable:$true] %s681
          %687 = dma.vmem_to_hbm [thread:$0]  %s682, 256, %s680, %s662, 128, 128, 8
        $region48: #{tpu_custom_call.1} parent=31 // pred_fallthru
          _
        // Predicated region
        $region49: #{tpu_custom_call.1} parent=31 // pred_check
          %p688 = pneg %p168
        $region50: #{tpu_custom_call.1} parent=31 // pred_check_branch
          %690 = sbr.rel (%p688) target = $region52
        $region51: #{tpu_custom_call.1} parent=31 // pred_region
          %s691 = smul.u32 2, %s32
          %s693 = ssub.s32 256, 256
          %694 = vsyncadd %s667, %s693
          %s695 = sadd.s32 %s33, %s691
          %s696 = smul.addr %s695, 128
          %s697 = scalar_lea.hbm %s4, %s696
          %s698 = sshll.u32 %s670, 4
          %s699 = int_to_ptr.vmem [resolvable:$true] %s698
          %704 = dma.vmem_to_hbm [thread:$0]  %s699, 256, %s697, %s667, 128, 128, 8
        $region52: #{tpu_custom_call.1} parent=31 // pred_fallthru
          _
      $region32: #{tpu_custom_call.1} parent=5 // pred_fallthru
        _
      %p705 = scmp.le.s32.totalorder 2, %s23
      // Predicated region
      $region53: #{tpu_custom_call.1} parent=5 // pred_check
        %p706 = pneg %p705
      $region54: #{tpu_custom_call.1} parent=5 // pred_check_branch
        %708 = sbr.rel (%p706) target = $region56
      $region55: #{tpu_custom_call.1} parent=5 // pred_region
        %s709 = ssub.s32 %s23, 2
        // Predicated region
        $region57: #{tpu_custom_call.1} parent=55 // pred_check
          %p710 = pneg %p146
        $region58: #{tpu_custom_call.1} parent=55 // pred_check_branch
          %712 = sbr.rel (%p710) target = $region60
        $region59: #{tpu_custom_call.1} parent=55 // pred_region
          %s713 = sand.u32 %s131, 1
          %s714 = scalar_lea.sflag [#allocation4], %s713
          %s715 = sand.u32 %s131, 1
          %s716 = smul.addr %s715, 16
          %s717 = scalar_lea.vmem [#allocation8], %s716
          %718 = dma.done %s714, 256
        $region60: #{tpu_custom_call.1} parent=55 // pred_fallthru
          _
        // Predicated region
        $region61: #{tpu_custom_call.1} parent=55 // pred_check
          %p719 = pneg %p174
        $region62: #{tpu_custom_call.1} parent=55 // pred_check_branch
          %721 = sbr.rel (%p719) target = $region64
        $region63: #{tpu_custom_call.1} parent=55 // pred_region
          %s722 = sand.u32 %s159, 1
          %s723 = scalar_lea.sflag [#allocation10], %s722
          %s724 = sand.u32 %s159, 1
          %s725 = smul.addr %s724, 16
          %s726 = scalar_lea.vmem [#allocation9], %s725
          %727 = dma.done %s723, 256
        $region64: #{tpu_custom_call.1} parent=55 // pred_fallthru
          _
      $region56: #{tpu_custom_call.1} parent=5 // pred_fallthru
        _
    $region6: #{tpu_custom_call.1} parent=1 // loop_footer
      %s27 = sadd.s32 1, %s23
    $region7: #{tpu_custom_call.1} parent=1 // loop_footer_branch
      %22 = sbr.rel target = $region3
    $region8: #{tpu_custom_call.1} parent=1 // loop_exit
      _
    %728 = vsyncpa [#allocation3], 1
    %s729 = scalar_lea.sflag [#allocation3], 1
    %730 = vsyncpa %s729, 1
    %731 = vsyncpa [#allocation6], 1
    %s732 = scalar_lea.sflag [#allocation6], 1
    %733 = vsyncpa %s732, 1
    %734 = vsyncpa [#allocation4], 1
    %s735 = scalar_lea.sflag [#allocation4], 1
    %736 = vsyncpa %s735, 1
    %737 = vsyncpa [#allocation10], 1
    %s738 = scalar_lea.sflag [#allocation10], 1
    %739 = vsyncpa %s738, 1

</llo_original>
